<compile_context>
chip_gen: v6e
topology: v6e:2x2x1
jax: 0.10.0
libtpu: 0.0.40
codegen_flags: <defaults>
</compile_context>

<pallas_src>
import functools
import math

import jax
import jax.numpy as jnp
from jax.experimental import pallas as pl
from jax.experimental.pallas import tpu as pltpu


def _round_up(x: int, m: int) -> int:
    return ((x + m - 1) // m) * m


def _mlp_kernel(x_ref, w1_ref, b1_ref, w2_ref, b2_ref, o_ref, *, use_bf16_dot):
    x = x_ref[...]
    w1 = w1_ref[...]
    w2 = w2_ref[...]
    if use_bf16_dot:
        # Single cast point before each MXU op; accumulation stays f32.
        x = x.astype(jnp.bfloat16)
        w1 = w1.astype(jnp.bfloat16)
        w2 = w2.astype(jnp.bfloat16)
    # First linear (MXU) + bias + ReLU (VPU, f32: v5e has no bf16 VALU).
    h = jnp.dot(x, w1, preferred_element_type=jnp.float32)
    h = jnp.maximum(h + b1_ref[...], 0.0)
    if use_bf16_dot:
        h = h.astype(jnp.bfloat16)
    # Second linear (MXU) + bias.
    y = jnp.dot(h, w2, preferred_element_type=jnp.float32)
    o_ref[...] = (y + b2_ref[...]).astype(o_ref.dtype)


@functools.partial(jax.jit, static_argnames=("block_batch", "use_bf16_dot"))
def liner_qnet_forward(x, w1, b1, w2, b2, *, block_batch=1024,
                       use_bf16_dot=False):
    """Forward pass of Liner_Qnet as a single fused Pallas kernel.

    x : (B, in_features)                     -- streamed unpadded
    w1: (in_features, hidden[_padded])       b1: (1, hidden[_padded])
    w2: (hidden[_padded], out_features)      b2: (1, out_features)
    returns (B, out_features)

    Weights may (and should, for MXU-tile alignment) have their hidden dim
    pre-padded ONCE via pad_params_hidden(); the kernel works either way.
    """
    B, in_features = x.shape
    in_w1, hidden = w1.shape
    hid_w2, out_features = w2.shape
    assert in_w1 == in_features and hid_w2 == hidden
    dtype = x.dtype
    itemsize = dtype.itemsize

    # --- Batch tiling ------------------------------------------------------
    # Tail-only padding: batch rounded up to a multiple of 8 sublanes (not to
    # a full tile), so wasted work is < 8 rows per call.
    b_p = _round_up(B, 8)
    tb = _round_up(min(block_batch, b_p), 8)          # always a multiple of 8
    # v7x has 2 TensorCores: once there is enough work, keep >= 4 tiles so
    # the "parallel" batch axis can actually be split. Harmless on v5e/v6e.
    if b_p >= 1024:
        tb = min(tb, _round_up(pl.cdiv(b_p, 4), 8))

    # Keep the per-step VMEM footprint well under the default scoped VMEM on
    # all chips (v5e 16 MiB / v6e 32 MiB / v7x 32 MiB of 64 MiB physical):
    # resident weights + 2x double-buffered x/out tiles + f32 intermediates.
    def _vmem_bytes(t):
        weights = (w1.size + b1.size + w2.size + b2.size) * itemsize
        io = 2 * 2 * t * (in_features + out_features) * itemsize
        inter = 2 * t * hidden * 4
        return weights + io + inter

    while tb > 8 and _vmem_bytes(tb) > (12 << 20):
        tb = max(8, _round_up(tb // 2, 8))

    grid = (pl.cdiv(b_p, tb),)

    # Pad x only if B is not already a multiple of 8 (cheap, tail rows only).
    x_in = x if b_p == B else jnp.zeros((b_p, in_features), dtype).at[:B].set(x)

    # True (unpadded-feature) flops / bytes so XLA's scheduling isn't skewed.
    cost = pl.CostEstimate(
        flops=2 * b_p * (in_features * hidden + hidden * out_features),
        transcendentals=0,
        bytes_accessed=(b_p * in_features + w1.size + b1.size + w2.size
                        + b2.size + b_p * out_features) * itemsize,
    )

    out = pl.pallas_call(
        functools.partial(_mlp_kernel, use_bf16_dot=use_bf16_dot),
        out_shape=jax.ShapeDtypeStruct((b_p, out_features), dtype),
        grid_spec=pltpu.PrefetchScalarGridSpec(
            num_scalar_prefetch=0,
            grid=grid,
            in_specs=[
                # x: tiled along batch, feature dim streamed at its real width
                # (block last-dim == full array dim is legal even if < 128).
                pl.BlockSpec((tb, in_features), lambda i: (i, 0)),
                # Weights / biases: VMEM-resident across all grid steps.
                pl.BlockSpec((in_features, hidden), lambda i: (0, 0)),
                pl.BlockSpec((1, hidden), lambda i: (0, 0)),
                pl.BlockSpec((hidden, out_features), lambda i: (0, 0)),
                pl.BlockSpec((1, out_features), lambda i: (0, 0)),
            ],
            out_specs=pl.BlockSpec((tb, out_features), lambda i: (i, 0)),
        ),
        compiler_params=pltpu.CompilerParams(
            # Batch tiles are independent -> v7x may split them across its
            # two TensorCores; no-op on single-TC v5e/v6e.
            dimension_semantics=("parallel",),
        ),
        cost_estimate=cost,
    )(x_in, w1, b1, w2, b2)

    return out if b_p == B else out[:B]


def pad_params_hidden(w1, b1, w2, b2, lane=128):
    """Pad the hidden dim of the (tiny, VMEM-resident) params to a multiple
    of 128 lanes ONCE at init/load time -- not per forward call.

    Zero padding is numerically inert: relu(0 + 0) = 0 and the zero rows of
    w2 contribute nothing.  The input/output feature dims are deliberately
    left unpadded so x and the output stream to/from HBM at their logical
    widths (that stream dominates the cost of this kernel).
    """
    in_f, hidden = w1.shape
    out_f = w2.shape[1]
    hid_p = _round_up(hidden, lane)
    if hid_p == hidden:
        return w1, b1, w2, b2
    w1_p = jnp.zeros((in_f, hid_p), w1.dtype).at[:, :hidden].set(w1)
    b1_p = jnp.zeros((1, hid_p), b1.dtype).at[:, :hidden].set(b1)
    w2_p = jnp.zeros((hid_p, out_f), w2.dtype).at[:hidden, :].set(w2)
    return w1_p, b1_p, w2_p, b2


def init_params(key, input_size, hidden_size, output_size, dtype=jnp.float32):
    """Deterministic init mimicking PyTorch nn.Linear (U(-k, k), k=1/sqrt(fan_in))."""
    k1, k2, k3, k4 = jax.random.split(key, 4)
    bound1 = 1.0 / math.sqrt(input_size)
    bound2 = 1.0 / math.sqrt(hidden_size)
    w1 = jax.random.uniform(k1, (input_size, hidden_size), dtype,
                            minval=-bound1, maxval=bound1)
    b1 = jax.random.uniform(k2, (1, hidden_size), dtype,
                            minval=-bound1, maxval=bound1)
    w2 = jax.random.uniform(k3, (hidden_size, output_size), dtype,
                            minval=-bound2, maxval=bound2)
    b2 = jax.random.uniform(k4, (1, output_size), dtype,
                            minval=-bound2, maxval=bound2)
    return w1, b1, w2, b2


if __name__ == "__main__":
    # Small shapes consistent with the module: batch=8, in=16, hidden=32, out=4.
    input_size, hidden_size, output_size = 16, 32, 4
    batch = 8

    key = jax.random.PRNGKey(0)
    k_x, k_p = jax.random.split(key)
    x = jax.random.normal(k_x, (batch, input_size), dtype=jnp.float32)
    w1, b1, w2, b2 = init_params(k_p, input_size, hidden_size, output_size)

    # Pad the hidden dim of the weights ONCE, outside the jitted forward.
    w1_p, b1_p, w2_p, b2_p = pad_params_hidden(w1, b1, w2, b2)

    out = liner_qnet_forward(x, w1_p, b1_p, w2_p, b2_p)
    out = jax.block_until_ready(out)

    # Pure-JAX reference of the same math (un-padded params).
    ref = jnp.maximum(x @ w1 + b1, 0.0) @ w2 + b2
    assert out.shape == (batch, output_size)
    assert jnp.allclose(out, ref, atol=1e-5, rtol=1e-5)

    print("KERNEL_OK")
</pallas_src>

<mosaic_0001>
module attributes {stable_mosaic.version = 11 : i64} {
  func.func @_mlp_kernel(%arg0: i32, %arg1: memref<8x16xf32, #tpu.memory_space<vmem>>, %arg2: memref<16x128xf32, #tpu.memory_space<vmem>>, %arg3: memref<1x128xf32, #tpu.memory_space<vmem>>, %arg4: memref<128x4xf32, #tpu.memory_space<vmem>>, %arg5: memref<1x4xf32, #tpu.memory_space<vmem>>, %arg6: memref<8x4xf32, #tpu.memory_space<vmem>>) attributes {dimension_semantics = [#tpu.dimension_semantics<parallel>], iteration_bounds = array<i64: 1>, scalar_prefetch = 0 : i64, scratch_operands = 0 : i64, tpu.core_type = #tpu.core_type<tc>, window_params = [{transform_indices = @transform_0, window_bounds = array<i64: 8, 16>}, {pipeline_mode = #tpu.pipeline_mode<synchronous>, transform_indices = @transform_1, window_bounds = array<i64: 16, 128>}, {pipeline_mode = #tpu.pipeline_mode<synchronous>, transform_indices = @transform_2, window_bounds = array<i64: 1, 128>}, {pipeline_mode = #tpu.pipeline_mode<synchronous>, transform_indices = @transform_3, window_bounds = array<i64: 128, 4>}, {pipeline_mode = #tpu.pipeline_mode<synchronous>, transform_indices = @transform_4, window_bounds = array<i64: 1, 4>}, {transform_indices = @transform_5, window_bounds = array<i64: 8, 4>}]} {
    %c0 = arith.constant 0 : index
    %c0_0 = arith.constant 0 : index
    %0 = vector.load %arg1[%c0, %c0_0] : memref<8x16xf32, #tpu.memory_space<vmem>>, vector<8x16xf32>
    %c0_1 = arith.constant 0 : index
    %c0_2 = arith.constant 0 : index
    %1 = vector.load %arg2[%c0_1, %c0_2] : memref<16x128xf32, #tpu.memory_space<vmem>>, vector<16x128xf32>
    %c0_3 = arith.constant 0 : index
    %c0_4 = arith.constant 0 : index
    %2 = vector.load %arg4[%c0_3, %c0_4] : memref<128x4xf32, #tpu.memory_space<vmem>>, vector<128x4xf32>
    %cst = arith.constant dense<0.000000e+00> : vector<8x128xf32>
    %3 = tpu.matmul %0, %1, %cst {dimension_numbers = #tpu.dot_dimension_numbers<[1], [0], [0], [1], [0, 0, 1, 1], [], []>} : vector<8x16xf32>, vector<16x128xf32>, vector<8x128xf32> -> vector<8x128xf32>
    %c0_5 = arith.constant 0 : index
    %c0_6 = arith.constant 0 : index
    %4 = vector.load %arg3[%c0_5, %c0_6] : memref<1x128xf32, #tpu.memory_space<vmem>>, vector<1x128xf32>
    %5 = vector.broadcast %4 : vector<1x128xf32> to vector<8x128xf32>
    %6 = arith.addf %3, %5 : vector<8x128xf32>
    %cst_7 = arith.constant 0.000000e+00 : f32
    %7 = vector.broadcast %cst_7 : f32 to vector<8x128xf32>
    %8 = arith.maximumf %6, %7 : vector<8x128xf32>
    %cst_8 = arith.constant dense<0.000000e+00> : vector<8x4xf32>
    %9 = tpu.matmul %8, %2, %cst_8 {dimension_numbers = #tpu.dot_dimension_numbers<[1], [0], [0], [1], [0, 0, 1, 1], [], []>} : vector<8x128xf32>, vector<128x4xf32>, vector<8x4xf32> -> vector<8x4xf32>
    %c0_9 = arith.constant 0 : index
    %c0_10 = arith.constant 0 : index
    %10 = vector.load %arg5[%c0_9, %c0_10] : memref<1x4xf32, #tpu.memory_space<vmem>>, vector<1x4xf32>
    %11 = vector.broadcast %10 : vector<1x4xf32> to vector<8x4xf32>
    %12 = arith.addf %9, %11 : vector<8x4xf32>
    %c0_11 = arith.constant 0 : index
    %c0_12 = arith.constant 0 : index
    %13 = vector.load %arg6[%c0_11, %c0_12] : memref<8x4xf32, #tpu.memory_space<vmem>>, vector<8x4xf32>
    tpu.vector_store %arg6[%c0_11, %c0_12], %12 {strides = array<i32>} : memref<8x4xf32, #tpu.memory_space<vmem>>, vector<8x4xf32>,
    return
  }
  func.func @transform_0(%arg0: i32) -> (i32, i32) {
    %c0_i32 = arith.constant 0 : i32
    %c0_i32_0 = arith.constant 0 : i32
    return %arg0, %c0_i32 : i32, i32
  }
  func.func @transform_1(%arg0: i32) -> (i32, i32) {
    %c0_i32 = arith.constant 0 : i32
    %c0_i32_0 = arith.constant 0 : i32
    %c0_i32_1 = arith.constant 0 : i32
    return %c0_i32, %c0_i32_0 : i32, i32
  }
  func.func @transform_2(%arg0: i32) -> (i32, i32) {
    %c0_i32 = arith.constant 0 : i32
    %c0_i32_0 = arith.constant 0 : i32
    %c0_i32_1 = arith.constant 0 : i32
    return %c0_i32, %c0_i32_0 : i32, i32
  }
  func.func @transform_3(%arg0: i32) -> (i32, i32) {
    %c0_i32 = arith.constant 0 : i32
    %c0_i32_0 = arith.constant 0 : i32
    %c0_i32_1 = arith.constant 0 : i32
    return %c0_i32, %c0_i32_0 : i32, i32
  }
  func.func @transform_4(%arg0: i32) -> (i32, i32) {
    %c0_i32 = arith.constant 0 : i32
    %c0_i32_0 = arith.constant 0 : i32
    %c0_i32_1 = arith.constant 0 : i32
    return %c0_i32, %c0_i32_0 : i32, i32
  }
  func.func @transform_5(%arg0: i32) -> (i32, i32) {
    %c0_i32 = arith.constant 0 : i32
    %c0_i32_0 = arith.constant 0 : i32
    return %arg0, %c0_i32 : i32, i32
  }
}

</mosaic_0001>

<llo_original>
// kernel: liner_qnet_forward.1
$region0: #{liner_qnet_forward.1}
  #allocation0 [shape = 'u32[]', space=smem, size = 0x4, offset = 0x4, fixed_abs, tag = 'smem constant byte address 0x4 - core index']
  #allocation1 [shape = 'u32[144,128]{1,0:T(1,128)}', space=vmem, size = 0x12000, scoped, tag = 'internal scratch']
  %s0 = inlined_call_operand.vmem [shape: f32[8,16], index: 0, kind: input, shape index: {}]
  %s1 = inlined_call_operand.vmem [shape: f32[16,128], index: 1, kind: input, shape index: {}]
  %s2 = inlined_call_operand.vmem [shape: f32[1,128], index: 2, kind: input, shape index: {}]
  %s3 = inlined_call_operand.vmem [shape: f32[128,4], index: 3, kind: input, shape index: {}]
  %s4 = inlined_call_operand.vmem [shape: f32[1,4], index: 4, kind: input, shape index: {}]
  %s5 = inlined_call_operand.vmem [shape: f32[8,4], index: 5, kind: output, shape index: {}]
  %s6 = sld [smem:[#allocation0]]
  $region30: #{liner_qnet_forward.1} parent=0
    _
  %s8 = ssub.s32 1, %s6
  %s9 = scalar_select 0, %s8, %s6
  // Predicated region
  $region2: #{liner_qnet_forward.1} parent=0 // pred_check
    _
  $region3: #{liner_qnet_forward.1} parent=0 // pred_check_branch
    %11 = sbr.rel (0) target = $region5
  $region4: #{liner_qnet_forward.1} parent=0 // pred_region
    _
  $region5: #{liner_qnet_forward.1} parent=0 // pred_fallthru
    _
  // Predicated region
  $region6: #{liner_qnet_forward.1} parent=0 // pred_check
    _
  $region7: #{liner_qnet_forward.1} parent=0 // pred_check_branch
    %13 = sbr.rel (0) target = $region9
  $region8: #{liner_qnet_forward.1} parent=0 // pred_region
    _
  $region9: #{liner_qnet_forward.1} parent=0 // pred_fallthru
    _
  // Predicated region
  $region10: #{liner_qnet_forward.1} parent=0 // pred_check
    _
  $region11: #{liner_qnet_forward.1} parent=0 // pred_check_branch
    %15 = sbr.rel (0) target = $region13
  $region12: #{liner_qnet_forward.1} parent=0 // pred_region
    _
  $region13: #{liner_qnet_forward.1} parent=0 // pred_fallthru
    _
  // Predicated region
  $region14: #{liner_qnet_forward.1} parent=0 // pred_check
    _
  $region15: #{liner_qnet_forward.1} parent=0 // pred_check_branch
    %17 = sbr.rel (0) target = $region17
  $region16: #{liner_qnet_forward.1} parent=0 // pred_region
    _
  $region17: #{liner_qnet_forward.1} parent=0 // pred_fallthru
    _
  // Predicated region
  $region18: #{liner_qnet_forward.1} parent=0 // pred_check
    _
  $region19: #{liner_qnet_forward.1} parent=0 // pred_check_branch
    %19 = sbr.rel (0) target = $region21
  $region20: #{liner_qnet_forward.1} parent=0 // pred_region
    _
  $region21: #{liner_qnet_forward.1} parent=0 // pred_fallthru
    _
  %v20 = vld [vmem:[%s0] sm:$0xff]
  %v21 = vld [vmem:[%s1] sm:$0xff]
  %v22 = vld [vmem:[%s1 + $0x8] sm:$0xff]
  %v23 = vld [vmem:[%s3] sm:$0xff]
  %v24 = vld [vmem:[%s3 + $0x8] sm:$0xff]
  %v25 = vld [vmem:[%s3 + $0x10] sm:$0xff]
  %v26 = vld [vmem:[%s3 + $0x18] sm:$0xff]
  %v27 = vld [vmem:[%s3 + $0x20] sm:$0xff]
  %v28 = vld [vmem:[%s3 + $0x28] sm:$0xff]
  %v29 = vld [vmem:[%s3 + $0x30] sm:$0xff]
  %v30 = vld [vmem:[%s3 + $0x38] sm:$0xff]
  %v31 = vld [vmem:[%s3 + $0x40] sm:$0xff]
  %v32 = vld [vmem:[%s3 + $0x48] sm:$0xff]
  %v33 = vld [vmem:[%s3 + $0x50] sm:$0xff]
  %v34 = vld [vmem:[%s3 + $0x58] sm:$0xff]
  %v35 = vld [vmem:[%s3 + $0x60] sm:$0xff]
  %v36 = vld [vmem:[%s3 + $0x68] sm:$0xff]
  %v37 = vld [vmem:[%s3 + $0x70] sm:$0xff]
  %v38 = vld [vmem:[%s3 + $0x78] sm:$0xff]
  %v39 = vld [vmem:[%s2] sm:$0x1]
  %v41 = vlaneseq
  %v42 = vshrl.u32 %v41, 7
  %v43 = vsub.s32 0, %v42
  %v44 = vrot.slane %v39, %v43
  %vm46 = vcmask 130048
  %v48 = vsel %vm46, %v20, 0
  %50 = vmatprep.subr.mxu0 0.0
  %51 = vmatpush1.msra.mxu0 0.0
  %52 = vmatprep.subr.mxu0 0.0
  %53 = vmatpush1.msra.mxu0 0.0
  %54 = vmatprep.subr.mxu0 0.0
  %55 = vmatpush1.msra.mxu0 0.0
  %56 = vmatprep.subr.mxu0 0.0
  %57 = vmatpush1.msra.mxu0 0.0
  %58 = vmatprep.subr.mxu0 0.0
  %59 = vmatpush1.msra.mxu0 0.0
  %60 = vmatprep.subr.mxu0 0.0
  %61 = vmatpush1.msra.mxu0 0.0
  %62 = vmatprep.subr.mxu0 0.0
  %63 = vmatpush1.msra.mxu0 0.0
  %64 = vmatprep.subr.mxu0 0.0
  %65 = vmatpush1.msra.mxu0 0.0
  %66 = vmatprep.subr.mxu0 0.0
  %67 = vmatpush1.msra.mxu0 0.0
  %68 = vmatprep.subr.mxu0 0.0
  %69 = vmatpush1.msra.mxu0 0.0
  %70 = vmatprep.subr.mxu0 0.0
  %71 = vmatpush1.msra.mxu0 0.0
  %72 = vmatprep.subr.mxu0 0.0
  %73 = vmatpush1.msra.mxu0 0.0
  %74 = vmatprep.subr.mxu0 0.0
  %75 = vmatpush1.msra.mxu0 0.0
  %76 = vmatprep.subr.mxu0 0.0
  %77 = vmatpush1.msra.mxu0 0.0
  %78 = vmatprep.subr.mxu0 0.0
  %79 = vmatpush1.msra.mxu0 %v22
  %80 = vmatprep.subr.mxu0 0.0
  %81 = vmatpush1.msra.mxu0 %v21
  %82 = vmatprep.subr.mxu0 0.0
  %83 = vmatpush2.msra.mxu0 0.0
  %84 = vmatprep.subr.mxu0 0.0
  %85 = vmatpush2.msra.mxu0 0.0
  %86 = vmatprep.subr.mxu0 0.0
  %87 = vmatpush2.msra.mxu0 0.0
  %88 = vmatprep.subr.mxu0 0.0
  %89 = vmatpush2.msra.mxu0 0.0
  %90 = vmatprep.subr.mxu0 0.0
  %91 = vmatpush2.msra.mxu0 0.0
  %92 = vmatprep.subr.mxu0 0.0
  %93 = vmatpush2.msra.mxu0 0.0
  %94 = vmatprep.subr.mxu0 0.0
  %95 = vmatpush2.msra.mxu0 0.0
  %96 = vmatprep.subr.mxu0 0.0
  %97 = vmatpush2.msra.mxu0 0.0
  %98 = vmatprep.subr.mxu0 0.0
  %99 = vmatpush2.msra.mxu0 0.0
  %100 = vmatprep.subr.mxu0 0.0
  %101 = vmatpush2.msra.mxu0 0.0
  %102 = vmatprep.subr.mxu0 0.0
  %103 = vmatpush2.msra.mxu0 0.0
  %104 = vmatprep.subr.mxu0 0.0
  %105 = vmatpush2.msra.mxu0 0.0
  %106 = vmatprep.subr.mxu0 0.0
  %107 = vmatpush2.msra.mxu0 0.0
  %108 = vmatprep.subr.mxu0 0.0
  %109 = vmatpush2.msra.mxu0 0.0
  %110 = vmatprep.subr.mxu0 0.0
  %111 = vmatpush2.msra.mxu0 0.0
  %112 = vmatprep.subr.mxu0 0.0
  %113 = vmatpush2.msra.mxu0 0.0
  %114 = vmatprep.mubr.f32.mxu0 0.0
  %115 = vmatmul.mubr.f32.gmra.mxu0 %v48
  %v116 = vpop.f32.mrf.mxu0
  %v117 = vadd.f32 %v44, %v116
  %v118 = vpop.f32.mrf.mxu0
  %119 = vdwg.mxu0
  %v120 = vmax.f32 %v117, 0.0
  %v121 = vld [vmem:[%s4] sm:$0x1]
  %v123 = vlaneseq
  %v124 = vshrl.u32 %v123, 7
  %v125 = vsub.s32 0, %v124
  %v126 = vrot.slane %v121, %v125
  %128 = vmatprep.subr.mxu0 0.0
  %129 = vmatpush1.msra.mxu0 %v38
  %130 = vmatprep.subr.mxu0 0.0
  %131 = vmatpush1.msra.mxu0 %v37
  %132 = vmatprep.subr.mxu0 0.0
  %133 = vmatpush1.msra.mxu0 %v36
  %134 = vmatprep.subr.mxu0 0.0
  %135 = vmatpush1.msra.mxu0 %v35
  %136 = vmatprep.subr.mxu0 0.0
  %137 = vmatpush1.msra.mxu0 %v34
  %138 = vmatprep.subr.mxu0 0.0
  %139 = vmatpush1.msra.mxu0 %v33
  %140 = vmatprep.subr.mxu0 0.0
  %141 = vmatpush1.msra.mxu0 %v32
  %142 = vmatprep.subr.mxu0 0.0
  %143 = vmatpush1.msra.mxu0 %v31
  %144 = vmatprep.subr.mxu0 0.0
  %145 = vmatpush1.msra.mxu0 %v30
  %146 = vmatprep.subr.mxu0 0.0
  %147 = vmatpush1.msra.mxu0 %v29
  %148 = vmatprep.subr.mxu0 0.0
  %149 = vmatpush1.msra.mxu0 %v28
  %150 = vmatprep.subr.mxu0 0.0
  %151 = vmatpush1.msra.mxu0 %v27
  %152 = vmatprep.subr.mxu0 0.0
  %153 = vmatpush1.msra.mxu0 %v26
  %154 = vmatprep.subr.mxu0 0.0
  %155 = vmatpush1.msra.mxu0 %v25
  %156 = vmatprep.subr.mxu0 0.0
  %157 = vmatpush1.msra.mxu0 %v24
  %158 = vmatprep.subr.mxu0 0.0
  %159 = vmatpush1.msra.mxu0 %v23
  %160 = vmatprep.subr.mxu0 0.0
  %161 = vmatpush2.msra.mxu0 0.0
  %162 = vmatprep.subr.mxu0 0.0
  %163 = vmatpush2.msra.mxu0 0.0
  %164 = vmatprep.subr.mxu0 0.0
  %165 = vmatpush2.msra.mxu0 0.0
  %166 = vmatprep.subr.mxu0 0.0
  %167 = vmatpush2.msra.mxu0 0.0
  %168 = vmatprep.subr.mxu0 0.0
  %169 = vmatpush2.msra.mxu0 0.0
  %170 = vmatprep.subr.mxu0 0.0
  %171 = vmatpush2.msra.mxu0 0.0
  %172 = vmatprep.subr.mxu0 0.0
  %173 = vmatpush2.msra.mxu0 0.0
  %174 = vmatprep.subr.mxu0 0.0
  %175 = vmatpush2.msra.mxu0 0.0
  %176 = vmatprep.subr.mxu0 0.0
  %177 = vmatpush2.msra.mxu0 0.0
  %178 = vmatprep.subr.mxu0 0.0
  %179 = vmatpush2.msra.mxu0 0.0
  %180 = vmatprep.subr.mxu0 0.0
  %181 = vmatpush2.msra.mxu0 0.0
  %182 = vmatprep.subr.mxu0 0.0
  %183 = vmatpush2.msra.mxu0 0.0
  %184 = vmatprep.subr.mxu0 0.0
  %185 = vmatpush2.msra.mxu0 0.0
  %186 = vmatprep.subr.mxu0 0.0
  %187 = vmatpush2.msra.mxu0 0.0
  %188 = vmatprep.subr.mxu0 0.0
  %189 = vmatpush2.msra.mxu0 0.0
  %190 = vmatprep.subr.mxu0 0.0
  %191 = vmatpush2.msra.mxu0 0.0
  %192 = vmatprep.mubr.f32.mxu0 0.0
  %193 = vmatmul.mubr.f32.gmra.mxu0 %v120
  %v194 = vpop.f32.mrf.mxu0
  %v195 = vadd.f32 %v126, %v194
  %v196 = vpop.f32.mrf.mxu0
  %197 = vdwg.mxu0
  %vm198 = vcmask 31744
  %199 = vst.msk [vmem:[%s5] sm:$0xff] %vm198, %v195
  // Predicated region
  $region22: #{liner_qnet_forward.1} parent=0 // pred_check
    _
  $region23: #{liner_qnet_forward.1} parent=0 // pred_check_branch
    %201 = sbr.rel (0) target = $region25
  $region24: #{liner_qnet_forward.1} parent=0 // pred_region
    _
  $region25: #{liner_qnet_forward.1} parent=0 // pred_fallthru
    _
  // Predicated region
  $region26: #{liner_qnet_forward.1} parent=0 // pred_check
    _
  $region27: #{liner_qnet_forward.1} parent=0 // pred_check_branch
    %203 = sbr.rel (0) target = $region29
  $region28: #{liner_qnet_forward.1} parent=0 // pred_region
    _
  $region29: #{liner_qnet_forward.1} parent=0 // pred_fallthru
    _

</llo_original>
